<compile_context>
chip_gen: v7x
topology: tpu7x:2x2x1
jax: 0.10.0
libtpu: 0.0.40
codegen_flags: <defaults>
</compile_context>

<pallas_src>
import functools

import jax
import jax.numpy as jnp
from jax import lax
from jax.experimental import pallas as pl
from jax.experimental.pallas import tpu as pltpu

FRAME = 128    # samples per frame (stand-in for HuBERT conv feature stride)
HIDDEN = 256   # embedding dimension (stand-in for HuBERT hidden size)


def _round_up(x, m):
    return (x + m - 1) // m * m


# ---------------------------------------------------------------------------
# Fused kernel.
#   frames_ref : [t1p + t2p, FRAME]  (waveform-1 rows first; each half 8-padded)
#   w_ref      : [FRAME, HIDDEN]
#   out_ref    : [1, 1] SMEM scalar (mean cosine similarity)
# ---------------------------------------------------------------------------
def _similarity_kernel(frames_ref, w_ref, out_ref, *, t1p, tm):
    x = frames_ref[...]                               # [rows, FRAME] f32
    w = w_ref[...]                                    # [FRAME, HIDDEN] f32

    # waveform /= max(abs(waveform)) -- as a reciprocal-multiply per waveform.
    # (Scale cancels in the cosine, but normalization is kept so intermediate
    #  embeddings match the module's semantics. Zero-padded rows don't change
    #  the |max| of a non-silent waveform.)
    peak1 = jnp.max(jnp.abs(x[:t1p, :]))
    peak2 = jnp.max(jnp.abs(x[t1p:, :]))
    row = lax.broadcasted_iota(jnp.int32, x.shape, 0)
    inv = jnp.where(row < t1p, 1.0 / peak1, 1.0 / peak2)
    xn = x * inv

    # Single stacked matmul for BOTH waveforms (MXU, f32 accumulate).
    e = jnp.dot(xn, w, preferred_element_type=jnp.float32)   # [rows, HIDDEN]

    # cosine_similarity(out1[:tm], out2[:tm], dim=1, eps=1e-8).mean()
    a = e[:tm, :]                                     # first tm rows of wave 1
    b = e[t1p:t1p + tm, :]                            # first tm rows of wave 2
    eps = jnp.float32(1e-8)
    dot_ab = jnp.sum(a * b, axis=1, keepdims=True)    # [tm, 1]
    sa = jnp.sum(a * a, axis=1, keepdims=True)
    sb = jnp.sum(b * b, axis=1, keepdims=True)
    # max(||a||,eps)*max(||b||,eps) == sqrt(max(sa,eps^2)*max(sb,eps^2))
    denom_sq = jnp.maximum(sa, eps * eps) * jnp.maximum(sb, eps * eps)
    cos = dot_ab * lax.rsqrt(denom_sq)                # rsqrt -> EUP slot
    out_ref[0, 0] = jnp.sum(cos) * jnp.float32(1.0 / tm)


@jax.jit
def _fused_similarity(frames1, frames2, w):
    t1, t2 = frames1.shape[0], frames2.shape[0]
    tm = min(t1, t2)                      # min_length
    t1p = _round_up(t1, 8)                # 8-pad each half: clean sublane tiles
    t2p = _round_up(t2, 8)
    f1 = jnp.pad(frames1, ((0, t1p - t1), (0, 0)))
    f2 = jnp.pad(frames2, ((0, t2p - t2), (0, 0)))
    frames = jnp.concatenate([f1, f2], axis=0)        # [t1p + t2p, FRAME]

    # Single block: at these sizes everything fits comfortably in VMEM.
    # TODO(synk): for realistic 16 kHz audio (T in the thousands) add a 1-D
    # grid over T with (256, FRAME) tiles, a constant index_map for w, and
    # dimension_semantics=("parallel",) (watch v7x's 64 MiB VMEM budget).
    res = pl.pallas_call(
        functools.partial(_similarity_kernel, t1p=t1p, tm=tm),
        out_shape=jax.ShapeDtypeStruct((1, 1), jnp.float32),
        in_specs=[pl.BlockSpec(memory_space=pltpu.VMEM),
                  pl.BlockSpec(memory_space=pltpu.VMEM)],
        out_specs=pl.BlockSpec(memory_space=pltpu.SMEM),
    )(frames, w)
    return res[0, 0]


# ---------------------------------------------------------------------------
# Module wrapper (mirrors MyModel.forward)
# ---------------------------------------------------------------------------
class MyModelPallas:
    def __init__(self):
        # Deterministic synthetic "model" parameters (frame projection matrix).
        kw = jax.random.PRNGKey(42)
        self.w = jax.random.normal(kw, (FRAME, HIDDEN), jnp.float32) * 0.02

    def forward(self, x1, x2):
        t1 = x1.shape[0] // FRAME
        t2 = x2.shape[0] // FRAME
        frames1 = x1[: t1 * FRAME].reshape(t1, FRAME)
        frames2 = x2[: t2 * FRAME].reshape(t2, FRAME)
        return _fused_similarity(frames1, frames2, self.w)   # scalar f32


if __name__ == "__main__":
    key = jax.random.PRNGKey(0)
    k1, k2 = jax.random.split(key)
    # Two "waveforms" of different lengths (8 frames vs 6 frames).
    x1 = jax.random.normal(k1, (8 * FRAME,), jnp.float32)
    x2 = jax.random.normal(k2, (6 * FRAME,), jnp.float32)

    model = MyModelPallas()
    score = model.forward(x1, x2)
    jax.block_until_ready(score)

    # Pure-JAX reference of the same path.
    def ref_encode(x, w):
        t = x.shape[0] // FRAME
        f = x[: t * FRAME].reshape(t, FRAME)
        f = f / jnp.max(jnp.abs(f))
        return f @ w

    e1 = ref_encode(x1, model.w)
    e2 = ref_encode(x2, model.w)
    m = min(e1.shape[0], e2.shape[0])
    a, b = e1[:m], e2[:m]
    cos = jnp.sum(a * b, 1) / (
        jnp.maximum(jnp.linalg.norm(a, axis=1), 1e-8)
        * jnp.maximum(jnp.linalg.norm(b, axis=1), 1e-8))
    ref = jnp.mean(cos)
    assert jnp.allclose(score, ref, atol=1e-5, rtol=1e-5), (score, ref)

    print("KERNEL_OK")
</pallas_src>

<mosaic_0001>
module attributes {stable_mosaic.version = 11 : i64} {
  func.func @_similarity_kernel(%arg0: memref<16x128xf32, #tpu.memory_space<vmem>>, %arg1: memref<128x256xf32, #tpu.memory_space<vmem>>, %arg2: memref<1x1xf32, #tpu.memory_space<smem>>) attributes {dimension_semantics = [], scalar_prefetch = 0 : i64, scratch_operands = 0 : i64, tpu.core_type = #tpu.core_type<tc>} {
    %c0 = arith.constant 0 : index
    %c0_0 = arith.constant 0 : index
    %0 = vector.load %arg0[%c0, %c0_0] : memref<16x128xf32, #tpu.memory_space<vmem>>, vector<16x128xf32>
    %c0_1 = arith.constant 0 : index
    %c0_2 = arith.constant 0 : index
    %1 = vector.load %arg1[%c0_1, %c0_2] : memref<128x256xf32, #tpu.memory_space<vmem>>, vector<128x256xf32>
    %2 = vector.extract_strided_slice %0 {offsets = [0, 0], sizes = [8, 128], strides = [1, 1]} : vector<16x128xf32> to vector<8x128xf32>
    %3 = math.absf %2 : vector<8x128xf32>
    %4 = vector.shape_cast %3 : vector<8x128xf32> to vector<1x8x128xf32>
    %cst = arith.constant dense<0xFF800000> : vector<1xf32>
    %5 = vector.multi_reduction <maximumf>, %4, %cst [1, 2] : vector<1x8x128xf32> to vector<1xf32>
    %6 = vector.shape_cast %5 : vector<1xf32> to vector<1x1x1xf32>
    %7 = vector.extract %6[0, 0, 0] : f32 from vector<1x1x1xf32>
    %8 = vector.extract_strided_slice %0 {offsets = [8, 0], sizes = [8, 128], strides = [1, 1]} : vector<16x128xf32> to vector<8x128xf32>
    %9 = math.absf %8 : vector<8x128xf32>
    %10 = vector.shape_cast %9 : vector<8x128xf32> to vector<1x8x128xf32>
    %cst_3 = arith.constant dense<0xFF800000> : vector<1xf32>
    %11 = vector.multi_reduction <maximumf>, %10, %cst_3 [1, 2] : vector<1x8x128xf32> to vector<1xf32>
    %12 = vector.shape_cast %11 : vector<1xf32> to vector<1x1x1xf32>
    %13 = vector.extract %12[0, 0, 0] : f32 from vector<1x1x1xf32>
    %14 = tpu.iota {dimensions = array<i32: 0>} : vector<16x128xi32>
    %c8_i32 = arith.constant 8 : i32
    %15 = vector.broadcast %c8_i32 : i32 to vector<16x128xi32>
    %16 = arith.cmpi slt, %14, %15 : vector<16x128xi32>
    %cst_4 = arith.constant 1.000000e+00 : f32
    %17 = arith.divf %cst_4, %7 : f32
    %cst_5 = arith.constant 1.000000e+00 : f32
    %18 = arith.divf %cst_5, %13 : f32
    %19 = vector.broadcast %17 : f32 to vector<16x128xf32>
    %20 = vector.broadcast %18 : f32 to vector<16x128xf32>
    %21 = arith.select %16, %19, %20 : vector<16x128xi1>, vector<16x128xf32>
    %22 = arith.mulf %0, %21 : vector<16x128xf32>
    %cst_6 = arith.constant dense<0.000000e+00> : vector<16x256xf32>
    %23 = tpu.matmul %22, %1, %cst_6 {dimension_numbers = #tpu.dot_dimension_numbers<[1], [0], [0], [1], [0, 0, 1, 1], [], []>} : vector<16x128xf32>, vector<128x256xf32>, vector<16x256xf32> -> vector<16x256xf32>
    %24 = vector.extract_strided_slice %23 {offsets = [0, 0], sizes = [6, 256], strides = [1, 1]} : vector<16x256xf32> to vector<6x256xf32>
    %25 = vector.extract_strided_slice %23 {offsets = [8, 0], sizes = [6, 256], strides = [1, 1]} : vector<16x256xf32> to vector<6x256xf32>
    %26 = arith.mulf %24, %25 : vector<6x256xf32>
    %cst_7 = arith.constant dense<0.000000e+00> : vector<6xf32>
    %27 = vector.multi_reduction <add>, %26, %cst_7 [1] : vector<6x256xf32> to vector<6xf32>
    %28 = vector.shape_cast %27 : vector<6xf32> to vector<6x1xf32>
    %29 = arith.mulf %24, %24 : vector<6x256xf32>
    %cst_8 = arith.constant dense<0.000000e+00> : vector<6xf32>
    %30 = vector.multi_reduction <add>, %29, %cst_8 [1] : vector<6x256xf32> to vector<6xf32>
    %31 = vector.shape_cast %30 : vector<6xf32> to vector<6x1xf32>
    %32 = arith.mulf %25, %25 : vector<6x256xf32>
    %cst_9 = arith.constant dense<0.000000e+00> : vector<6xf32>
    %33 = vector.multi_reduction <add>, %32, %cst_9 [1] : vector<6x256xf32> to vector<6xf32>
    %34 = vector.shape_cast %33 : vector<6xf32> to vector<6x1xf32>
    %cst_10 = arith.constant 9.99999993E-9 : f32
    %cst_11 = arith.constant 9.99999993E-9 : f32
    %35 = arith.mulf %cst_10, %cst_11 : f32
    %36 = vector.broadcast %35 : f32 to vector<6x1xf32>
    %37 = arith.maximumf %31, %36 : vector<6x1xf32>
    %cst_12 = arith.constant 9.99999993E-9 : f32
    %cst_13 = arith.constant 9.99999993E-9 : f32
    %38 = arith.mulf %cst_12, %cst_13 : f32
    %39 = vector.broadcast %38 : f32 to vector<6x1xf32>
    %40 = arith.maximumf %34, %39 : vector<6x1xf32>
    %41 = arith.mulf %37, %40 : vector<6x1xf32>
    %42 = math.rsqrt %41 : vector<6x1xf32>
    %43 = arith.mulf %28, %42 : vector<6x1xf32>
    %44 = vector.shape_cast %43 : vector<6x1xf32> to vector<1x6x1xf32>
    %cst_14 = arith.constant dense<0.000000e+00> : vector<1xf32>
    %45 = vector.multi_reduction <add>, %44, %cst_14 [1, 2] : vector<1x6x1xf32> to vector<1xf32>
    %46 = vector.shape_cast %45 : vector<1xf32> to vector<1x1x1xf32>
    %47 = vector.extract %46[0, 0, 0] : f32 from vector<1x1x1xf32>
    %cst_15 = arith.constant 0.166666672 : f32
    %48 = arith.mulf %47, %cst_15 : f32
    %c0_16 = arith.constant 0 : index
    %c0_17 = arith.constant 0 : index
    %49 = memref.load %arg2[%c0_16, %c0_17] : memref<1x1xf32, #tpu.memory_space<smem>>
    memref.store %48, %arg2[%c0_16, %c0_17] : memref<1x1xf32, #tpu.memory_space<smem>>
    return
  }
}

</mosaic_0001>

<llo_original>
// kernel: _fused_similarity.1
$region0: #{_fused_similarity.1}
  #allocation0 [shape = 'u32[]', space=smem, size = 0x4, offset = 0x4, fixed_abs, tag = 'smem constant byte address 0x4 - core index']
  #allocation1 [shape = 'u32[144,128]{1,0:T(1,128)}', space=vmem, size = 0x12000, scoped, tag = 'internal scratch']
  %s0 = inlined_call_operand.vmem [shape: f32[16,128], index: 0, kind: input, shape index: {}]
  %s1 = inlined_call_operand.hbm [shape: f32[128,256], index: 1, kind: input, shape index: {}]
  %s2 = inlined_call_operand.hbm [shape: f32[1,1], index: 2, kind: output, shape index: {}]
  %s3 = sld [smem:[#allocation0]]
  $region22: #{_fused_similarity.1} parent=0
    _
  %s5 = ssub.s32 1, %s3
  %s6 = scalar_select 0, %s5, %s3
  $region1: #{_fused_similarity.1} parent=0
    #allocation2 [shape = 'u8[131072]{0}', space=vmem, size = 0x20000, scoped, tag = 'input window, operand 1, single buffered']
    #allocation3 [shape = 's32[1]{0}', space=sflag, size = 0x4, scoped, tag = 'scoped memory for _fused_similarity.1']
    #allocation4 [shape = 's32[1]{0}', space=sflag, size = 0x4, scoped, tag = 'scoped memory for _fused_similarity.1']
    #allocation5 [shape = 'u8[512]{0}', space=smem, size = 0x200, scoped, tag = 'output window, operand 0, single buffered']
    %7 = vsyncpa [#allocation3], 0
    %8 = vsyncpa [#allocation4], 0
    // Predicated region
    $region2: #{_fused_similarity.1} parent=1 // pred_check
      _
    $region3: #{_fused_similarity.1} parent=1 // pred_check_branch
      %10 = sbr.rel (0) target = $region5
    $region4: #{_fused_similarity.1} parent=1 // pred_region
      _
    $region5: #{_fused_similarity.1} parent=1 // pred_fallthru
      _
    // Predicated region
    $region6: #{_fused_similarity.1} parent=1 // pred_check
      _
    $region7: #{_fused_similarity.1} parent=1 // pred_check_branch
      %12 = sbr.rel (0) target = $region9
    $region8: #{_fused_similarity.1} parent=1 // pred_region
      %s14 = ssub.s32 4096, 4096
      %15 = vsyncadd [#allocation3], %s14
      %s16 = sshll.u32 [#allocation2], 4
      %s17 = int_to_ptr.vmem [resolvable:$true] %s16
      %22 = dma.hbm_to_vmem [thread:$0]  %s1, 4096, %s17, [#allocation3], 256, 256, 16
    $region9: #{_fused_similarity.1} parent=1 // pred_fallthru
      _
    // Predicated region
    $region10: #{_fused_similarity.1} parent=1 // pred_check
      _
    $region11: #{_fused_similarity.1} parent=1 // pred_check_branch
      %24 = sbr.rel (0) target = $region13
    $region12: #{_fused_similarity.1} parent=1 // pred_region
      %25 = dma.done [#allocation3], 4096
    $region13: #{_fused_similarity.1} parent=1 // pred_fallthru
      _
    %v26 = vld [vmem:[%s0] sm:$0xff]
    %v27 = vld [vmem:[%s0 + $0x8] sm:$0xff]
    %v28 = vld [vmem:[#allocation2] sm:$0xff]
    %v29 = vld [vmem:[#allocation2 + $0x8] sm:$0xff]
    %v30 = vld [vmem:[#allocation2 + $0x10] sm:$0xff]
    %v31 = vld [vmem:[#allocation2 + $0x18] sm:$0xff]
    %v32 = vld [vmem:[#allocation2 + $0x20] sm:$0xff]
    %v33 = vld [vmem:[#allocation2 + $0x28] sm:$0xff]
    %v34 = vld [vmem:[#allocation2 + $0x30] sm:$0xff]
    %v35 = vld [vmem:[#allocation2 + $0x38] sm:$0xff]
    %v36 = vld [vmem:[#allocation2 + $0x40] sm:$0xff]
    %v37 = vld [vmem:[#allocation2 + $0x48] sm:$0xff]
    %v38 = vld [vmem:[#allocation2 + $0x50] sm:$0xff]
    %v39 = vld [vmem:[#allocation2 + $0x58] sm:$0xff]
    %v40 = vld [vmem:[#allocation2 + $0x60] sm:$0xff]
    %v41 = vld [vmem:[#allocation2 + $0x68] sm:$0xff]
    %v42 = vld [vmem:[#allocation2 + $0x70] sm:$0xff]
    %v43 = vld [vmem:[#allocation2 + $0x78] sm:$0xff]
    %v44 = vld [vmem:[#allocation2 + $0x80] sm:$0xff]
    %v45 = vld [vmem:[#allocation2 + $0x88] sm:$0xff]
    %v46 = vld [vmem:[#allocation2 + $0x90] sm:$0xff]
    %v47 = vld [vmem:[#allocation2 + $0x98] sm:$0xff]
    %v48 = vld [vmem:[#allocation2 + $0xa0] sm:$0xff]
    %v49 = vld [vmem:[#allocation2 + $0xa8] sm:$0xff]
    %v50 = vld [vmem:[#allocation2 + $0xb0] sm:$0xff]
    %v51 = vld [vmem:[#allocation2 + $0xb8] sm:$0xff]
    %v52 = vld [vmem:[#allocation2 + $0xc0] sm:$0xff]
    %v53 = vld [vmem:[#allocation2 + $0xc8] sm:$0xff]
    %v54 = vld [vmem:[#allocation2 + $0xd0] sm:$0xff]
    %v55 = vld [vmem:[#allocation2 + $0xd8] sm:$0xff]
    %v56 = vld [vmem:[#allocation2 + $0xe0] sm:$0xff]
    %v57 = vld [vmem:[#allocation2 + $0xe8] sm:$0xff]
    %v58 = vld [vmem:[#allocation2 + $0xf0] sm:$0xff]
    %v59 = vld [vmem:[#allocation2 + $0xf8] sm:$0xff]
    %v60 = vand.u32 2147483647, %v26
    %61 = vmax.xlane.f32.xlu0 %v60
    %v62 = vpop.xlane.xlu0 %61
    %v63 = vrot.slane %v62, 4
    %v64 = vmax.f32 %v62, %v63
    %v65 = vrot.slane %v64, 2
    %v66 = vmax.f32 %v64, %v65
    %v67 = vrot.slane %v66, 1
    %v68 = vmax.f32 %v66, %v67
    %s69 = vtos %v68
    %v70 = vand.u32 2147483647, %v27
    %71 = vmax.xlane.f32.xlu0 %v70
    %v72 = vpop.xlane.xlu0 %71
    %v73 = vrot.slane %v72, 4
    %v74 = vmax.f32 %v72, %v73
    %v75 = vrot.slane %v74, 2
    %v76 = vmax.f32 %v74, %v75
    %v77 = vrot.slane %v76, 1
    %v78 = vmax.f32 %v76, %v77
    %s79 = vtos %v78
    %v80 = vlaneseq
    %v81 = vshrl.u32 %v80, 7
    %v82 = vadd.s32 %v81, 8
    %vm83 = vcmp.lt.s32.totalorder %v81, 8
    %vm84 = vcmp.lt.s32.totalorder %v82, 8
    %v85 = vstv %s69
    %v86 = vrcp.pop %v85
    %s87 = vtos %v86
    %v88 = vstv %s79
    %v89 = vrcp.pop %v88
    %s90 = vtos %v89
    %v91 = vstv %s87
    %v92 = vstv %s90
    %v93 = vsel %vm83, %v91, %v92
    %v94 = vsel %vm84, %v91, %v92
    %v95 = vmul.f32 %v26, %v93
    %v96 = vmul.f32 %v27, %v94
    %97 = vmatprep.subr.mxu0 %v29
    %98 = vmatpush1.msra.mxu0 %v28
    %99 = vmatprep.subr.mxu0 %v31
    %100 = vmatpush1.msra.mxu0 %v30
    %101 = vmatprep.subr.mxu0 %v33
    %102 = vmatpush1.msra.mxu0 %v32
    %103 = vmatprep.subr.mxu0 %v35
    %104 = vmatpush1.msra.mxu0 %v34
    %105 = vmatprep.subr.mxu0 %v37
    %106 = vmatpush1.msra.mxu0 %v36
    %107 = vmatprep.subr.mxu0 %v39
    %108 = vmatpush1.msra.mxu0 %v38
    %109 = vmatprep.subr.mxu0 %v41
    %110 = vmatpush1.msra.mxu0 %v40
    %111 = vmatprep.subr.mxu0 %v43
    %112 = vmatpush1.msra.mxu0 %v42
    %113 = vmatprep.subr.mxu0 %v45
    %114 = vmatpush1.msra.mxu0 %v44
    %115 = vmatprep.subr.mxu0 %v47
    %116 = vmatpush1.msra.mxu0 %v46
    %117 = vmatprep.subr.mxu0 %v49
    %118 = vmatpush1.msra.mxu0 %v48
    %119 = vmatprep.subr.mxu0 %v51
    %120 = vmatpush1.msra.mxu0 %v50
    %121 = vmatprep.subr.mxu0 %v53
    %122 = vmatpush1.msra.mxu0 %v52
    %123 = vmatprep.subr.mxu0 %v55
    %124 = vmatpush1.msra.mxu0 %v54
    %125 = vmatprep.subr.mxu0 %v57
    %126 = vmatpush1.msra.mxu0 %v56
    %127 = vmatprep.subr.mxu0 %v59
    %128 = vmatpush1.msra.mxu0 %v58
    %129 = vmatprep.subr.mxu0 0.0
    %130 = vmatpush1.msra.mxu0 0.0
    %131 = vmatprep.subr.mxu0 0.0
    %132 = vmatpush1.msra.mxu0 0.0
    %133 = vmatprep.subr.mxu0 0.0
    %134 = vmatpush1.msra.mxu0 0.0
    %135 = vmatprep.subr.mxu0 0.0
    %136 = vmatpush1.msra.mxu0 0.0
    %137 = vmatprep.subr.mxu0 0.0
    %138 = vmatpush1.msra.mxu0 0.0
    %139 = vmatprep.subr.mxu0 0.0
    %140 = vmatpush1.msra.mxu0 0.0
    %141 = vmatprep.subr.mxu0 0.0
    %142 = vmatpush1.msra.mxu0 0.0
    %143 = vmatprep.subr.mxu0 0.0
    %144 = vmatpush1.msra.mxu0 0.0
    %145 = vmatprep.subr.mxu0 0.0
    %146 = vmatpush1.msra.mxu0 0.0
    %147 = vmatprep.subr.mxu0 0.0
    %148 = vmatpush1.msra.mxu0 0.0
    %149 = vmatprep.subr.mxu0 0.0
    %150 = vmatpush1.msra.mxu0 0.0
    %151 = vmatprep.subr.mxu0 0.0
    %152 = vmatpush1.msra.mxu0 0.0
    %153 = vmatprep.subr.mxu0 0.0
    %154 = vmatpush1.msra.mxu0 0.0
    %155 = vmatprep.subr.mxu0 0.0
    %156 = vmatpush1.msra.mxu0 0.0
    %157 = vmatprep.subr.mxu0 0.0
    %158 = vmatpush1.msra.mxu0 0.0
    %159 = vmatprep.subr.mxu0 0.0
    %160 = vmatpush1.msra.mxu0 0.0
    %161 = vmatprep.mubr.f32.mxu0 0.0
    %162 = vmatmul.mubr.f32.gmra.mrb[0].mxu0 %v95
    %v163 = vpop.f32.mrb[0].mxu0
    %v164 = vadd.f32 0.0, %v163
    %v165 = vpop.f32.mrb[0].mxu0
    %v166 = vadd.f32 0.0, %v165
    %167 = vmatprep.mubr.f32.mxu0 0.0
    %168 = vmatmul.mubr.f32.gmra.mrb[0].mxu0 %v96
    %v169 = vpop.f32.mrb[0].mxu0
    %v170 = vadd.f32 0.0, %v169
    %v171 = vpop.f32.mrb[0].mxu0
    %v172 = vadd.f32 0.0, %v171
    %173 = vdwg.mxu0
    %v174 = vmul.f32 %v164, %v170
    %v175 = vmul.f32 %v166, %v172
    %vm176 = vcmask 1045504
    %v177 = vsel %vm176, %v174, 0.0
    %v178 = vsel %vm176, %v175, 0.0
    %v179 = vadd.f32 %v177, %v178
    %180 = vadd.xlane.f32.xlu0 %v179
    %v181 = vpop.xlane.xlu0 %180
    %v182 = vmul.f32 %v164, %v164
    %v183 = vmul.f32 %v166, %v166
    %v184 = vsel %vm176, %v182, 0.0
    %v185 = vsel %vm176, %v183, 0.0
    %v186 = vadd.f32 %v184, %v185
    %187 = vadd.xlane.f32.xlu0 %v186
    %v188 = vpop.xlane.xlu0 %187
    %v189 = vmul.f32 %v170, %v170
    %v190 = vmul.f32 %v172, %v172
    %v191 = vsel %vm176, %v189, 0.0
    %v192 = vsel %vm176, %v190, 0.0
    %v193 = vadd.f32 %v191, %v192
    %194 = vadd.xlane.f32.xlu0 %v193
    %v195 = vpop.xlane.xlu0 %194
    %v196 = vmax.f32 %v188, 1e-16
    %v197 = vmax.f32 %v195, 1e-16
    %v198 = vmul.f32 %v196, %v197
    %v199 = vrsqrt.pop %v198
    %v200 = vmul.f32 %v181, %v199
    %vm201 = vcmask 5120
    %v202 = vsel %vm201, %v200, 0.0
    %203 = vadd.xlane.f32.xlu0 %v202
    %v204 = vpop.xlane.xlu0 %203
    %v205 = vrot.slane %v204, 4
    %v206 = vadd.f32 %v204, %v205
    %v207 = vrot.slane %v206, 2
    %v208 = vadd.f32 %v206, %v207
    %v209 = vrot.slane %v208, 1
    %v210 = vadd.f32 %v208, %v209
    %s211 = vtos %v210
    %s212 = smul.f32 %s211, 0.16666667
    %s213 = scalar_lea.smem [#allocation5], 0
    %214 = sst [smem:[%s213]] %s212
    // Predicated region
    $region14: #{_fused_similarity.1} parent=1 // pred_check
      _
    $region15: #{_fused_similarity.1} parent=1 // pred_check_branch
      %216 = sbr.rel (0) target = $region17
    $region16: #{_fused_similarity.1} parent=1 // pred_region
      %s218 = ssub.s32 16, 16
      %219 = vsyncadd [#allocation4], %s218
      %222 = dma.smem_to_hbm [#allocation5], 16, %s2, [#allocation4]
    $region17: #{_fused_similarity.1} parent=1 // pred_fallthru
      _
    // Predicated region
    $region18: #{_fused_similarity.1} parent=1 // pred_check
      _
    $region19: #{_fused_similarity.1} parent=1 // pred_check_branch
      %224 = sbr.rel (0) target = $region21
    $region20: #{_fused_similarity.1} parent=1 // pred_region
      %225 = dma.done [#allocation4], 16
    $region21: #{_fused_similarity.1} parent=1 // pred_fallthru
      _
    %226 = sfence
    %227 = vsyncpa [#allocation3], 1
    %228 = vsyncpa [#allocation4], 1

</llo_original>
